<compile_context>
chip_gen: v5e
topology: v5e:2x2
jax: 0.10.0
libtpu: 0.0.40
codegen_flags: <defaults>
</compile_context>

<pallas_src>
import functools

import jax
import jax.numpy as jnp
from jax.experimental import pallas as pl
from jax.experimental.pallas import tpu as pltpu


def _round_up(a, m):
    return ((a + m - 1) // m) * m


def policy_kernel(x_ref, w1_ref, b1_ref, wh_ref, bh_ref, out_ref, *, n_action):
    """One batch tile: fused affine1+ReLU, fused (action|value) head, softmax.

    out_ref is a [Bt, n_action + 1] f32 block:
      columns [0, n_action)  -> softmax(action logits)
      column  n_action       -> state value
    """
    x = x_ref[...]                                                     # [Bt, n_obs]

    # affine1 + ReLU
    h = jnp.dot(x, w1_ref[...], preferred_element_type=jnp.float32) + b1_ref[...]
    h = jnp.maximum(h, jnp.float32(0.0))                               # [Bt, 128]

    # Fused (action | value | zero-pad) head: a single 128-wide MXU pass.
    z = jnp.dot(h, wh_ref[...], preferred_element_type=jnp.float32) + bh_ref[...]

    col = jax.lax.broadcasted_iota(jnp.int32, z.shape, dimension=1)
    is_action = col < n_action                                         # action-logit lanes

    # Masked, max-subtracted softmax over the action lanes only (float32).
    # TODO(synk): torch computes this softmax in float64; kept f32 in-kernel.
    logits = jnp.where(is_action, z, jnp.float32(-jnp.inf))
    m = jnp.max(logits, axis=-1, keepdims=True)
    e = jnp.exp(logits - m)                                            # masked lanes -> 0
    s = jnp.sum(e, axis=-1, keepdims=True)
    prob = e / s                                                       # exact: sums to 1 in f32

    # Lane n_action carries the value head; lanes >= n_action+1 are dropped
    # by the narrow store below (6x less HBM writeback than the 128-wide slab).
    combined = jnp.where(is_action, prob, z)
    n_out = out_ref.shape[-1]                                          # n_action + 1 (static)
    out_ref[...] = combined[:, :n_out]


def fuse_head_params(raw_params):
    """Concatenate action/value heads into one zero-padded [H, 128] weight."""
    w1, b1, wa, ba, wv, bv = raw_params
    hidden = w1.shape[1]
    n_action = wa.shape[1]
    n_out = n_action + 1
    out_w = _round_up(n_out, 128)                                      # lane-dense MXU tile
    wh = (jnp.zeros((hidden, out_w), jnp.float32)
          .at[:, :n_action].set(wa)
          .at[:, n_action:n_out].set(wv))
    bh = (jnp.zeros((1, out_w), jnp.float32)
          .at[:, :n_action].set(ba)
          .at[:, n_action:n_out].set(bv))
    return (w1, b1, wh, bh), n_action


def _choose_batch_tiling(B, max_tile, min_rows_per_core=512):
    """Padding-aware batch tiling, with a >=2 (even) step grid for large B
    so both v7x TensorCores get balanced work."""
    B = max(B, 1)
    steps = int(pl.cdiv(B, max_tile))
    if B >= 2 * min_rows_per_core:
        steps = max(steps, 2)
        if steps % 2:
            steps += 1
    bt = _round_up(int(pl.cdiv(B, steps)), 8)                          # multiple of 8 sublanes
    bp = bt * steps                                                    # padded batch, >= B
    return bt, bp, steps


@functools.partial(jax.jit, static_argnames=("n_action", "max_batch_tile"))
def policy_forward(x, fused_params, *, n_action, max_batch_tile=2048):
    """x: [B, n_obs] float32.  Returns (action_prob [B, n_action] f32,
    state_values [B, 1] f32)."""
    w1, b1, wh, bh = fused_params
    B, n_obs = x.shape
    hidden = w1.shape[1]
    out_w = wh.shape[1]
    n_out = n_action + 1

    bt, bp, steps = _choose_batch_tiling(B, max_batch_tile)
    xp = x if bp == B else jnp.pad(x, ((0, bp - B), (0, 0)))

    kernel = functools.partial(policy_kernel, n_action=n_action)
    out = pl.pallas_call(
        kernel,
        out_shape=jax.ShapeDtypeStruct((bp, n_out), jnp.float32),
        grid_spec=pltpu.PrefetchScalarGridSpec(
            num_scalar_prefetch=0,
            grid=(steps,),
            in_specs=[
                pl.BlockSpec((bt, n_obs), lambda i: (i, 0)),       # x tile (K=32, unpadded)
                pl.BlockSpec((n_obs, hidden), lambda i: (0, 0)),   # W1 (grid-resident)
                pl.BlockSpec((1, hidden), lambda i: (0, 0)),       # b1
                pl.BlockSpec((hidden, out_w), lambda i: (0, 0)),   # fused head W
                pl.BlockSpec((1, out_w), lambda i: (0, 0)),        # fused head b
            ],
            # Narrow (n_action+1)-wide output: full-dim block, contiguous HBM rows.
            out_specs=pl.BlockSpec((bt, n_out), lambda i: (i, 0)),
        ),
        compiler_params=pltpu.CompilerParams(
            dimension_semantics=("parallel",)),                    # megacore sharding on v7x
    )(xp, w1, b1, wh, bh)

    action_prob = out[:B, :n_action]
    state_values = out[:B, n_action:n_out]
    return action_prob, state_values


def init_params(key, n_observations, n_action, hidden=128):
    """Deterministic init.  Weights stored as [in, out] (transposed vs torch)."""
    k1, k2, k3, k4, k5, k6 = jax.random.split(key, 6)

    def unif(k, shape, fan_in):
        bound = 1.0 / jnp.sqrt(jnp.float32(fan_in))
        return jax.random.uniform(k, shape, dtype=jnp.float32,
                                  minval=-bound, maxval=bound)

    w1 = unif(k1, (n_observations, hidden), n_observations)
    b1 = unif(k2, (1, hidden), n_observations)
    wa = unif(k3, (hidden, n_action), hidden)
    ba = unif(k4, (1, n_action), hidden)
    wv = unif(k5, (hidden, 1), hidden)
    bv = unif(k6, (1, 1), hidden)
    return (w1, b1, wa, ba, wv, bv)


def policy_reference(x, raw_params):
    """Pure-JAX reference matching the torch forward (float32)."""
    w1, b1, wa, ba, wv, bv = raw_params
    h = jnp.maximum(x @ w1 + b1, 0.0)
    prob = jax.nn.softmax(h @ wa + ba, axis=-1)
    val = h @ wv + bv
    return prob, val


def _check(x, raw_params, fused_params, n_act):
    prob, val = policy_forward(x, fused_params, n_action=n_act)
    jax.block_until_ready((prob, val))
    B = x.shape[0]
    assert prob.shape == (B, n_act) and prob.dtype == jnp.float32
    assert val.shape == (B, 1) and val.dtype == jnp.float32
    ref_prob, ref_val = policy_reference(x, raw_params)
    assert bool(jnp.all(jnp.abs(jnp.sum(prob, axis=-1) - 1.0) < 1e-3))
    assert bool(jnp.allclose(prob, ref_prob, rtol=1e-2, atol=1e-2))
    assert bool(jnp.allclose(val, ref_val, rtol=1e-3, atol=1e-4))


if __name__ == "__main__":
    key = jax.random.PRNGKey(0)
    n_observations = 32   # stand-in for len(env.reset(...)) of WordleEnv20
    n_action = 20         # stand-in for env action-space size
    hidden = 128

    k_x, k_x2, k_x3, k_p = jax.random.split(key, 4)
    raw_params = init_params(k_p, n_observations, n_action, hidden)
    fused_params, n_act = fuse_head_params(raw_params)

    # --- small batch (the typical RL rollout shape) -----------------------
    x_small = jax.random.normal(k_x, (2, n_observations), dtype=jnp.float32)
    _check(x_small, raw_params, fused_params, n_act)

    # --- medium batch: exercises padding-aware tile choice (304-row tile) --
    x_med = jax.random.normal(k_x2, (300, n_observations), dtype=jnp.float32)
    _check(x_med, raw_params, fused_params, n_act)

    # --- large batch: exercises the >=2-step (even) parallel grid ----------
    x_big = jax.random.normal(k_x3, (2500, n_observations), dtype=jnp.float32)
    _check(x_big, raw_params, fused_params, n_act)

    print("KERNEL_OK")
</pallas_src>

<mosaic_0001>
module attributes {stable_mosaic.version = 11 : i64} {
  func.func @policy_kernel(%arg0: i32, %arg1: memref<8x32xf32, #tpu.memory_space<vmem>>, %arg2: memref<32x128xf32, #tpu.memory_space<vmem>>, %arg3: memref<1x128xf32, #tpu.memory_space<vmem>>, %arg4: memref<128x128xf32, #tpu.memory_space<vmem>>, %arg5: memref<1x128xf32, #tpu.memory_space<vmem>>, %arg6: memref<8x21xf32, #tpu.memory_space<vmem>>) attributes {dimension_semantics = [#tpu.dimension_semantics<parallel>], iteration_bounds = array<i64: 1>, scalar_prefetch = 0 : i64, scratch_operands = 0 : i64, tpu.core_type = #tpu.core_type<tc>, window_params = [{transform_indices = @transform_0, window_bounds = array<i64: 8, 32>}, {pipeline_mode = #tpu.pipeline_mode<synchronous>, transform_indices = @transform_1, window_bounds = array<i64: 32, 128>}, {pipeline_mode = #tpu.pipeline_mode<synchronous>, transform_indices = @transform_2, window_bounds = array<i64: 1, 128>}, {pipeline_mode = #tpu.pipeline_mode<synchronous>, transform_indices = @transform_3, window_bounds = array<i64: 128, 128>}, {pipeline_mode = #tpu.pipeline_mode<synchronous>, transform_indices = @transform_4, window_bounds = array<i64: 1, 128>}, {transform_indices = @transform_5, window_bounds = array<i64: 8, 21>}]} {
    %c0 = arith.constant 0 : index
    %c0_0 = arith.constant 0 : index
    %0 = vector.load %arg1[%c0, %c0_0] : memref<8x32xf32, #tpu.memory_space<vmem>>, vector<8x32xf32>
    %c0_1 = arith.constant 0 : index
    %c0_2 = arith.constant 0 : index
    %1 = vector.load %arg2[%c0_1, %c0_2] : memref<32x128xf32, #tpu.memory_space<vmem>>, vector<32x128xf32>
    %cst = arith.constant dense<0.000000e+00> : vector<8x128xf32>
    %2 = tpu.matmul %0, %1, %cst {dimension_numbers = #tpu.dot_dimension_numbers<[1], [0], [0], [1], [0, 0, 1, 1], [], []>} : vector<8x32xf32>, vector<32x128xf32>, vector<8x128xf32> -> vector<8x128xf32>
    %c0_3 = arith.constant 0 : index
    %c0_4 = arith.constant 0 : index
    %3 = vector.load %arg3[%c0_3, %c0_4] : memref<1x128xf32, #tpu.memory_space<vmem>>, vector<1x128xf32>
    %4 = vector.broadcast %3 : vector<1x128xf32> to vector<8x128xf32>
    %5 = arith.addf %2, %4 : vector<8x128xf32>
    %cst_5 = arith.constant 0.000000e+00 : f32
    %6 = vector.broadcast %cst_5 : f32 to vector<8x128xf32>
    %7 = arith.maximumf %5, %6 : vector<8x128xf32>
    %c0_6 = arith.constant 0 : index
    %c0_7 = arith.constant 0 : index
    %8 = vector.load %arg4[%c0_6, %c0_7] : memref<128x128xf32, #tpu.memory_space<vmem>>, vector<128x128xf32>
    %cst_8 = arith.constant dense<0.000000e+00> : vector<8x128xf32>
    %9 = tpu.matmul %7, %8, %cst_8 {dimension_numbers = #tpu.dot_dimension_numbers<[1], [0], [0], [1], [0, 0, 1, 1], [], []>} : vector<8x128xf32>, vector<128x128xf32>, vector<8x128xf32> -> vector<8x128xf32>
    %c0_9 = arith.constant 0 : index
    %c0_10 = arith.constant 0 : index
    %10 = vector.load %arg5[%c0_9, %c0_10] : memref<1x128xf32, #tpu.memory_space<vmem>>, vector<1x128xf32>
    %11 = vector.broadcast %10 : vector<1x128xf32> to vector<8x128xf32>
    %12 = arith.addf %9, %11 : vector<8x128xf32>
    %13 = tpu.iota {dimensions = array<i32: 1>} : vector<8x128xi32>
    %c20_i32 = arith.constant 20 : i32
    %14 = vector.broadcast %c20_i32 : i32 to vector<8x128xi32>
    %15 = arith.cmpi slt, %13, %14 : vector<8x128xi32>
    %cst_11 = arith.constant 0xFF800000 : f32
    %16 = vector.broadcast %cst_11 : f32 to vector<8x128xf32>
    %17 = arith.select %15, %12, %16 : vector<8x128xi1>, vector<8x128xf32>
    %cst_12 = arith.constant dense<0xFF800000> : vector<8xf32>
    %18 = vector.multi_reduction <maximumf>, %17, %cst_12 [1] : vector<8x128xf32> to vector<8xf32>
    %19 = vector.shape_cast %18 : vector<8xf32> to vector<8x1xf32>
    %20 = vector.broadcast %19 : vector<8x1xf32> to vector<8x128xf32>
    %21 = arith.subf %17, %20 : vector<8x128xf32>
    %22 = math.exp %21 : vector<8x128xf32>
    %cst_13 = arith.constant dense<0.000000e+00> : vector<8xf32>
    %23 = vector.multi_reduction <add>, %22, %cst_13 [1] : vector<8x128xf32> to vector<8xf32>
    %24 = vector.shape_cast %23 : vector<8xf32> to vector<8x1xf32>
    %25 = vector.broadcast %24 : vector<8x1xf32> to vector<8x128xf32>
    %26 = arith.divf %22, %25 : vector<8x128xf32>
    %27 = arith.select %15, %26, %12 : vector<8x128xi1>, vector<8x128xf32>
    %28 = vector.extract_strided_slice %27 {offsets = [0, 0], sizes = [8, 21], strides = [1, 1]} : vector<8x128xf32> to vector<8x21xf32>
    %c0_14 = arith.constant 0 : index
    %c0_15 = arith.constant 0 : index
    %29 = vector.load %arg6[%c0_14, %c0_15] : memref<8x21xf32, #tpu.memory_space<vmem>>, vector<8x21xf32>
    tpu.vector_store %arg6[%c0_14, %c0_15], %28 {strides = array<i32>} : memref<8x21xf32, #tpu.memory_space<vmem>>, vector<8x21xf32>,
    return
  }
  func.func @transform_0(%arg0: i32) -> (i32, i32) {
    %c0_i32 = arith.constant 0 : i32
    %c0_i32_0 = arith.constant 0 : i32
    return %arg0, %c0_i32 : i32, i32
  }
  func.func @transform_1(%arg0: i32) -> (i32, i32) {
    %c0_i32 = arith.constant 0 : i32
    %c0_i32_0 = arith.constant 0 : i32
    %c0_i32_1 = arith.constant 0 : i32
    return %c0_i32, %c0_i32_0 : i32, i32
  }
  func.func @transform_2(%arg0: i32) -> (i32, i32) {
    %c0_i32 = arith.constant 0 : i32
    %c0_i32_0 = arith.constant 0 : i32
    %c0_i32_1 = arith.constant 0 : i32
    return %c0_i32, %c0_i32_0 : i32, i32
  }
  func.func @transform_3(%arg0: i32) -> (i32, i32) {
    %c0_i32 = arith.constant 0 : i32
    %c0_i32_0 = arith.constant 0 : i32
    %c0_i32_1 = arith.constant 0 : i32
    return %c0_i32, %c0_i32_0 : i32, i32
  }
  func.func @transform_4(%arg0: i32) -> (i32, i32) {
    %c0_i32 = arith.constant 0 : i32
    %c0_i32_0 = arith.constant 0 : i32
    %c0_i32_1 = arith.constant 0 : i32
    return %c0_i32, %c0_i32_0 : i32, i32
  }
  func.func @transform_5(%arg0: i32) -> (i32, i32) {
    %c0_i32 = arith.constant 0 : i32
    %c0_i32_0 = arith.constant 0 : i32
    return %arg0, %c0_i32 : i32, i32
  }
}

</mosaic_0001>

<llo_original>
// kernel: policy_forward.1
$region0: #{policy_forward.1}
  #allocation0 [shape = 'u32[]', space=smem, size = 0x4, offset = 0x4, fixed_abs, tag = 'smem constant byte address 0x4 - core index']
  #allocation1 [shape = 'u32[72,128]{1,0:T(1,128)}', space=vmem, size = 0x9000, scoped, tag = 'internal scratch']
  %s0 = inlined_call_operand.vmem [shape: f32[8,32], index: 0, kind: input, shape index: {}]
  %s1 = inlined_call_operand.hbm [shape: f32[32,128], index: 1, kind: input, shape index: {}]
  %s2 = inlined_call_operand.vmem [shape: f32[1,128], index: 2, kind: input, shape index: {}]
  %s3 = inlined_call_operand.hbm [shape: f32[128,128], index: 3, kind: input, shape index: {}]
  %s4 = inlined_call_operand.vmem [shape: f32[1,128], index: 4, kind: input, shape index: {}]
  %s5 = inlined_call_operand.vmem [shape: f32[8,21], index: 5, kind: output, shape index: {}]
  %s6 = sld [smem:[#allocation0]]
  $region38: #{policy_forward.1} parent=0
    _
  %s8 = ssub.s32 1, %s6
  %s9 = scalar_select 0, %s8, %s6
  $region1: #{policy_forward.1} parent=0
    #allocation2 [shape = 'u8[16384]{0}', space=vmem, size = 0x4000, scoped, tag = 'input window, operand 1, single buffered']
    #allocation3 [shape = 's32[1]{0}', space=sflag, size = 0x4, scoped, tag = 'scoped memory for policy_forward.1']
    #allocation4 [shape = 'u8[65536]{0}', space=vmem, size = 0x10000, scoped, tag = 'input window, operand 3, single buffered']
    #allocation5 [shape = 's32[1]{0}', space=sflag, size = 0x4, scoped, tag = 'scoped memory for policy_forward.1']
    %10 = vsyncpa [#allocation3], 0
    %11 = vsyncpa [#allocation5], 0
    // Predicated region
    $region2: #{policy_forward.1} parent=1 // pred_check
      _
    $region3: #{policy_forward.1} parent=1 // pred_check_branch
      %13 = sbr.rel (0) target = $region5
    $region4: #{policy_forward.1} parent=1 // pred_region
      _
    $region5: #{policy_forward.1} parent=1 // pred_fallthru
      _
    // Predicated region
    $region6: #{policy_forward.1} parent=1 // pred_check
      _
    $region7: #{policy_forward.1} parent=1 // pred_check_branch
      %15 = sbr.rel (0) target = $region9
    $region8: #{policy_forward.1} parent=1 // pred_region
      %17 = vsyncadd [#allocation3], 0
      %s18 = sshll.u32 %s1, 4
      %s19 = int_to_ptr.hbm [resolvable:$true] %s18
      %s20 = sshll.u32 [#allocation2], 4
      %s21 = int_to_ptr.vmem [resolvable:$true] %s20
      %26 = dma.hbm_to_vmem [thread:$0]  %s19, 512, %s21, [#allocation3], 128, 128, 8
    $region9: #{policy_forward.1} parent=1 // pred_fallthru
      _
    // Predicated region
    $region10: #{policy_forward.1} parent=1 // pred_check
      _
    $region11: #{policy_forward.1} parent=1 // pred_check_branch
      %28 = sbr.rel (0) target = $region13
    $region12: #{policy_forward.1} parent=1 // pred_region
      _
    $region13: #{policy_forward.1} parent=1 // pred_fallthru
      _
    // Predicated region
    $region14: #{policy_forward.1} parent=1 // pred_check
      _
    $region15: #{policy_forward.1} parent=1 // pred_check_branch
      %30 = sbr.rel (0) target = $region17
    $region16: #{policy_forward.1} parent=1 // pred_region
      %32 = vsyncadd [#allocation5], 0
      %s33 = sshll.u32 %s3, 4
      %s34 = int_to_ptr.hbm [resolvable:$true] %s33
      %s35 = sshll.u32 [#allocation4], 4
      %s36 = int_to_ptr.vmem [resolvable:$true] %s35
      %41 = dma.hbm_to_vmem [thread:$0]  %s34, 2048, %s36, [#allocation5], 128, 128, 8
    $region17: #{policy_forward.1} parent=1 // pred_fallthru
      _
    // Predicated region
    $region18: #{policy_forward.1} parent=1 // pred_check
      _
    $region19: #{policy_forward.1} parent=1 // pred_check_branch
      %43 = sbr.rel (0) target = $region21
    $region20: #{policy_forward.1} parent=1 // pred_region
      _
    $region21: #{policy_forward.1} parent=1 // pred_fallthru
      _
    // Predicated region
    $region22: #{policy_forward.1} parent=1 // pred_check
      _
    $region23: #{policy_forward.1} parent=1 // pred_check_branch
      %45 = sbr.rel (0) target = $region25
    $region24: #{policy_forward.1} parent=1 // pred_region
      %47 = dma.done [#allocation3], 512
    $region25: #{policy_forward.1} parent=1 // pred_fallthru
      _
    // Predicated region
    $region26: #{policy_forward.1} parent=1 // pred_check
      _
    $region27: #{policy_forward.1} parent=1 // pred_check_branch
      %49 = sbr.rel (0) target = $region29
    $region28: #{policy_forward.1} parent=1 // pred_region
      %51 = dma.done [#allocation5], 2048
    $region29: #{policy_forward.1} parent=1 // pred_fallthru
      _
    %v52 = vld [vmem:[%s0] sm:$0xff]
    %v53 = vld [vmem:[#allocation2] sm:$0xff]
    %v54 = vld [vmem:[#allocation2 + $0x8] sm:$0xff]
    %v55 = vld [vmem:[#allocation2 + $0x10] sm:$0xff]
    %v56 = vld [vmem:[#allocation2 + $0x18] sm:$0xff]
    %v57 = vld [vmem:[%s2] sm:$0x1]
    %v59 = vperm.slane %v57, 0
    %vm61 = vcmask 261120
    %v63 = vsel %vm61, %v52, 0
    %65 = vmatpush.msra.mxu0 0.0
    %66 = vmatpush.msra.mxu0 0.0
    %67 = vmatpush.msra.mxu0 0.0
    %68 = vmatpush.msra.mxu0 0.0
    %69 = vmatpush.msra.mxu0 0.0
    %70 = vmatpush.msra.mxu0 0.0
    %71 = vmatpush.msra.mxu0 0.0
    %72 = vmatpush.msra.mxu0 0.0
    %73 = vmatpush.msra.mxu0 0.0
    %74 = vmatpush.msra.mxu0 0.0
    %75 = vmatpush.msra.mxu0 0.0
    %76 = vmatpush.msra.mxu0 0.0
    %77 = vmatpush.msra.mxu0 %v56
    %78 = vmatpush.msra.mxu0 %v55
    %79 = vmatpush.msra.mxu0 %v54
    %80 = vmatpush.msra.mxu0 %v53
    %81 = vmatmul.f32.gmra.mxu0 %v63
    %v82 = vpop.f32.mrf.mxu0
    %v83 = vadd.f32 %v59, %v82
    %84 = vdwg.mxu0
    %v85 = vmax.f32 %v83, 0.0
    %v86 = vld [vmem:[#allocation4] sm:$0xff]
    %v87 = vld [vmem:[#allocation4 + $0x8] sm:$0xff]
    %v88 = vld [vmem:[#allocation4 + $0x10] sm:$0xff]
    %v89 = vld [vmem:[#allocation4 + $0x18] sm:$0xff]
    %v90 = vld [vmem:[#allocation4 + $0x20] sm:$0xff]
    %v91 = vld [vmem:[#allocation4 + $0x28] sm:$0xff]
    %v92 = vld [vmem:[#allocation4 + $0x30] sm:$0xff]
    %v93 = vld [vmem:[#allocation4 + $0x38] sm:$0xff]
    %v94 = vld [vmem:[#allocation4 + $0x40] sm:$0xff]
    %v95 = vld [vmem:[#allocation4 + $0x48] sm:$0xff]
    %v96 = vld [vmem:[#allocation4 + $0x50] sm:$0xff]
    %v97 = vld [vmem:[#allocation4 + $0x58] sm:$0xff]
    %v98 = vld [vmem:[#allocation4 + $0x60] sm:$0xff]
    %v99 = vld [vmem:[#allocation4 + $0x68] sm:$0xff]
    %v100 = vld [vmem:[#allocation4 + $0x70] sm:$0xff]
    %v101 = vld [vmem:[#allocation4 + $0x78] sm:$0xff]
    %v102 = vld [vmem:[%s4] sm:$0x1]
    %v104 = vperm.slane %v102, 0
    %106 = vmatpush.msra.mxu0 %v101
    %107 = vmatpush.msra.mxu0 %v100
    %108 = vmatpush.msra.mxu0 %v99
    %109 = vmatpush.msra.mxu0 %v98
    %110 = vmatpush.msra.mxu0 %v97
    %111 = vmatpush.msra.mxu0 %v96
    %112 = vmatpush.msra.mxu0 %v95
    %113 = vmatpush.msra.mxu0 %v94
    %114 = vmatpush.msra.mxu0 %v93
    %115 = vmatpush.msra.mxu0 %v92
    %116 = vmatpush.msra.mxu0 %v91
    %117 = vmatpush.msra.mxu0 %v90
    %118 = vmatpush.msra.mxu0 %v89
    %119 = vmatpush.msra.mxu0 %v88
    %120 = vmatpush.msra.mxu0 %v87
    %121 = vmatpush.msra.mxu0 %v86
    %122 = vmatmul.f32.gmra.mxu0 %v85
    %v123 = vpop.f32.mrf.mxu0
    %v124 = vadd.f32 %v104, %v123
    %125 = vdwg.mxu0
    %v126 = vlaneseq
    %v127 = vand.u32 %v126, 127
    %vm128 = vcmp.lt.s32.totalorder %v127, 20
    %v129 = vsel %vm128, %v124, -inf
    %130 = vmax.xlane.f32.xlu0 %v129
    %v131 = vpop.xlane.xlu0 %130
    %v132 = vsub.f32 %v129, %v131
    %v133 = vmul.f32 %v132, 1.442695
    %v134 = vpow.pop %v133
    %135 = vadd.xlane.f32.xlu0 %v134
    %v136 = vpop.xlane.xlu0 %135
    %v137 = vrcp.pop %v136
    %v138 = vmul.f32 %v136, %v137
    %v139 = vsub.f32 1.0, %v138
    %v140 = vmul.f32 %v137, %v139
    %v141 = vadd.f32 %v137, %v140
    %vm142 = vweird.f32 %v136
    %vm143 = vweird.f32 %v137
    %vm144 = vmor %vm142, %vm143
    %v145 = vsel %vm144, %v137, %v141
    %v146 = vand.u32 2147483647, %v136
    %vm147 = vcmp.eq.f32.partialorder %v146, 8.507059e+37
    %v148 = vand.u32 %v136, 2147483648
    %v149 = vor.u32 1.1754944e-38, %v148
    %v150 = vsel %vm147, %v149, %v145
    %v151 = vmul.f32 %v134, %v150
    %v152 = vsel %vm128, %v151, %v124
    %vm153 = vcmask 171008
    %154 = vst.msk [vmem:[%s5] sm:$0xff] %vm153, %v152
    // Predicated region
    $region30: #{policy_forward.1} parent=1 // pred_check
      _
    $region31: #{policy_forward.1} parent=1 // pred_check_branch
      %156 = sbr.rel (0) target = $region33
    $region32: #{policy_forward.1} parent=1 // pred_region
      _
    $region33: #{policy_forward.1} parent=1 // pred_fallthru
      _
    // Predicated region
    $region34: #{policy_forward.1} parent=1 // pred_check
      _
    $region35: #{policy_forward.1} parent=1 // pred_check_branch
      %158 = sbr.rel (0) target = $region37
    $region36: #{policy_forward.1} parent=1 // pred_region
      _
    $region37: #{policy_forward.1} parent=1 // pred_fallthru
      _
    %159 = vsyncpa [#allocation3], 1
    %160 = vsyncpa [#allocation5], 1

</llo_original>
